<compile_context>
chip_gen: v7x
topology: tpu7x:2x2x1
jax: 0.10.0
libtpu: 0.0.40
codegen_flags: <defaults>
</compile_context>

<pallas_src>
import numpy as np
import jax
import jax.numpy as jnp
from jax.experimental import pallas as pl
from jax.experimental.pallas import tpu as pltpu

IGNORE_THRES = 0.5
OBJ_SCALE = 10.0
NOOBJ_SCALE = 1.0
ALPHA = 0.25     # focal cross-entropy alpha
EPS = 1e-16

ROW_TILE = 1024                 # rows of 128 lanes per grid step (mult. of 16 for bf16)
VMEM_LIMIT = 32 * 1024 * 1024   # explicit scoped-VMEM budget (>= v5e 16 MiB default)


# ----------------------------------------------------------------------------
# Pallas kernel: fused elementwise loss terms + weighted partial sums.
#   v16_ref: (4, TR, 128) bf16  = [dx, dy, dw, dh]   (pred - target diffs)
#   v32_ref: (2, TR, 128) f32   = [conf, ws]         (ws = wobj - wnoobj)
#   out_ref: (4, 8, 128)  f32   per-step partials of
#            [sum(dxy*wobj), sum(dwh*wobj), sum(ce*wobj), sum(ce*wnoobj)]
# Each grid step owns its own output block (axis is "parallel"), so no
# init/accumulate phase is needed; the tiny reduction happens in the wrapper.
# ----------------------------------------------------------------------------
def _loss_sums_kernel(v16_ref, v32_ref, out_ref):
    dx = v16_ref[0].astype(jnp.float32)
    dy = v16_ref[1].astype(jnp.float32)
    dw = v16_ref[2].astype(jnp.float32)
    dh = v16_ref[3].astype(jnp.float32)
    conf = v32_ref[0]
    ws = v32_ref[1]

    # Unpack the signed weight channel (disjoint supports -> exact).
    wobj = jnp.maximum(ws, 0.0)
    wnoobj = wobj - ws
    is_obj = ws > 0.0

    dxy = dx * dx + dy * dy
    dwh = dw * dw + dh * dh

    # Focal CE with a single log per element: the obj / noobj branches have
    # disjoint support, so select the log argument and the coefficient.
    one_m_conf = 1.0 - conf
    t = jnp.where(is_obj, conf, one_m_conf)
    coef = jnp.where(is_obj,
                     ALPHA * (one_m_conf * one_m_conf),
                     (1.0 - ALPHA) * (conf * conf))
    ce = -coef * jnp.log(t + EPS)

    tr = conf.shape[0]

    def fold(v):
        # (TR,128) -> (8,128): layout-preserving regroup + vreg adds (VALU only).
        return jnp.sum(v.reshape(tr // 8, 8, 128), axis=0)

    out_ref[0] = fold(dxy * wobj)
    out_ref[1] = fold(dwh * wobj)
    out_ref[2] = fold(ce * wobj)
    out_ref[3] = fold(ce * wnoobj)


def loss_sums_pallas(v16, v32):
    """v16: (4, L) bf16 [dx,dy,dw,dh];  v32: (2, L) f32 [conf, ws].
    Returns (4,) f32 sums: [Σ dxy*wobj, Σ dwh*wobj, Σ ce*wobj, Σ ce*wnoobj]."""
    L = v16.shape[1]
    r_raw = pl.cdiv(L, 128)
    if r_raw <= ROW_TILE:
        tr = max(16, ((r_raw + 15) // 16) * 16)   # single block, bf16 sublane-full
    else:
        tr = ROW_TILE
    rpad = ((r_raw + tr - 1) // tr) * tr
    lpad = rpad * 128
    pad = lpad - L

    v16 = v16.astype(jnp.bfloat16)
    v32 = v32.astype(jnp.float32)
    if pad:
        # Zero padding is safe: ws == 0 there => both weights 0; conf == 0 lands
        # on the noobj CE branch with t = 1 (log(1) == 0) and coef == 0.
        v16 = jnp.concatenate([v16, jnp.zeros((4, pad), jnp.bfloat16)], axis=1)
        v32 = jnp.concatenate([v32, jnp.zeros((2, pad), jnp.float32)], axis=1)
    v16 = v16.reshape(4, rpad, 128)
    v32 = v32.reshape(2, rpad, 128)

    g = rpad // tr
    out = pl.pallas_call(
        _loss_sums_kernel,
        out_shape=jax.ShapeDtypeStruct((4 * g, 8, 128), jnp.float32),
        grid=(g,),
        in_specs=[pl.BlockSpec((4, tr, 128), lambda i: (0, i, 0)),
                  pl.BlockSpec((2, tr, 128), lambda i: (0, i, 0))],
        out_specs=pl.BlockSpec((4, 8, 128), lambda i: (i, 0, 0)),
        compiler_params=pltpu.CompilerParams(
            dimension_semantics=("parallel",),   # per-step output block -> 2 TCs on v7x
            vmem_limit_bytes=VMEM_LIMIT),
    )(v16, v32)
    # Final tiny (4g, 8, 128) reduction is a trivial XLA op.
    return out.reshape(g, 4, 8, 128).sum(axis=(0, 2, 3))


# ----------------------------------------------------------------------------
# Target assignment (plain JAX glue): reproduces the PyTorch scatter logic.
# anchors: (S, nA, 2); target: (nT, 5) rows = [batch, gx_norm, gy_norm, gw, gh]
# ----------------------------------------------------------------------------
def build_targets(target, anchors, nB, grid_sizes, ignore_thres=IGNORE_THRES):
    S, nA, _ = anchors.shape
    nT = target.shape[0]

    gwh_all = target[:, 3:5]                        # (nT, 2)
    anchors_flat = anchors.reshape(-1, 2)           # (S*nA, 2)
    w1 = anchors_flat[:, 0:1]
    h1 = anchors_flat[:, 1:2]
    w2 = gwh_all[None, :, 0]
    h2 = gwh_all[None, :, 1]
    inter = jnp.minimum(w1, w2) * jnp.minimum(h1, h2)
    ious = inter / (w1 * h1 + 1e-16 + w2 * h2 - inter)   # (S*nA, nT)

    best_n = jnp.argmax(ious, axis=0)               # (nT,)
    best_scale = best_n // nA
    best_anchor = (best_n % nA).astype(jnp.int32)

    b = target[:, 0].astype(jnp.int32)
    gw_t = target[:, 3]
    gh_t = target[:, 4]

    per_scale = []
    for i, (nGh, nGw) in enumerate(grid_sizes):
        sel = best_scale == i                       # (nT,)
        iou_i = ious[i * nA:(i + 1) * nA]           # (nA, nT)

        gx = target[:, 1] * nGw
        gy = target[:, 2] * nGh
        gi = gx.astype(jnp.int32)
        gj = gy.astype(jnp.int32)

        obj = jnp.zeros((nB, nGh, nGw, nA), jnp.float32)
        noobj = jnp.ones((nB, nGh, nGw, nA), jnp.float32)
        tx = jnp.zeros((nB, nGh, nGw, nA), jnp.float32)
        ty = jnp.zeros_like(tx)
        tw = jnp.zeros_like(tx)
        th = jnp.zeros_like(tx)

        # Out-of-range batch index for unselected targets -> scatter is dropped.
        b_sel = jnp.where(sel, b, nB)

        obj = obj.at[b_sel, gj, gi, best_anchor].set(1.0, mode="drop")
        noobj = noobj.at[b_sel, gj, gi, best_anchor].set(0.0, mode="drop")

        # ignore-threshold anchors of this scale
        ignore = (iou_i.T > ignore_thres) & sel[:, None]        # (nT, nA)
        b_ig = jnp.where(ignore, b[:, None], nB)                # (nT, nA)
        a_idx = jnp.broadcast_to(jnp.arange(nA, dtype=jnp.int32)[None, :], (nT, nA))
        noobj = noobj.at[b_ig, gj[:, None], gi[:, None], a_idx].set(0.0, mode="drop")

        anchor_w = anchors[i, best_anchor, 0]
        anchor_h = anchors[i, best_anchor, 1]
        tx = tx.at[b_sel, gj, gi, best_anchor].set(gx - jnp.floor(gx), mode="drop")
        ty = ty.at[b_sel, gj, gi, best_anchor].set(gy - jnp.floor(gy), mode="drop")
        tw = tw.at[b_sel, gj, gi, best_anchor].set(jnp.log(gw_t / anchor_w + 1e-16), mode="drop")
        th = th.at[b_sel, gj, gi, best_anchor].set(jnp.log(gh_t / anchor_h + 1e-16), mode="drop")

        per_scale.append((obj, noobj, tx, ty, tw, th))
    return per_scale


# ----------------------------------------------------------------------------
# Channel assembly: one channel-major slab pass per dtype, all scales fused.
#   bf16 slab: [dx, dy, dw, dh]          (4, L)
#   f32  slab: [conf, wobj - wnoobj]     (2, L)
# The per-scale / per-batch normalisation (1/obj_sum, 1/noobj_sum, 1/nB) is
# folded into the signed weight channel so the kernel only produces 4 sums.
# ----------------------------------------------------------------------------
def _assemble_channels(xs, per_scale, nB):
    d16_parts, f32_parts = [], []
    for xs_, (obj, noobj, tx, ty, tw, th) in zip(xs, per_scale):
        obj_sum = obj.sum(axis=(1, 2, 3), keepdims=True) + 1e-6     # (nB,1,1,1)
        noobj_sum = noobj.sum(axis=(1, 2, 3), keepdims=True) + 1e-6
        ws = obj / (obj_sum * nB) - noobj / (noobj_sum * nB)        # signed weight
        diffs = jnp.stack([xs_[..., 0] - tx, xs_[..., 1] - ty,
                           xs_[..., 2] - tw, xs_[..., 3] - th], axis=0)
        d16_parts.append(diffs.astype(jnp.bfloat16).reshape(4, -1))
        cw = jnp.stack([xs_[..., 4].astype(jnp.float32), ws], axis=0)
        f32_parts.append(cw.reshape(2, -1))
    v16 = d16_parts[0] if len(d16_parts) == 1 else jnp.concatenate(d16_parts, axis=1)
    v32 = f32_parts[0] if len(f32_parts) == 1 else jnp.concatenate(f32_parts, axis=1)
    return v16, v32


# ----------------------------------------------------------------------------
# Forward pass equivalent to loss_layer.forward.
# ----------------------------------------------------------------------------
def loss_layer_forward(xs, target, anchors,
                       obj_scale=OBJ_SCALE, noobj_scale=NOOBJ_SCALE,
                       ignore_thres=IGNORE_THRES):
    nB = xs[0].shape[0]
    grid_sizes = [(t.shape[1], t.shape[2]) for t in xs]

    if target.shape[0]:
        per_scale = build_targets(target, anchors, nB, grid_sizes, ignore_thres)
    else:
        # Empty-target branch: only the no-object CE term survives; obj == 0,
        # noobj == 1 everywhere make the folded weights reproduce conf_bce.mean().
        per_scale = []
        for xs_ in xs:
            shp = xs_.shape[:4]
            z = jnp.zeros(shp, jnp.float32)
            per_scale.append((z, jnp.ones(shp, jnp.float32), z, z, z, z))

    v16, v32 = _assemble_channels(xs, per_scale, nB)
    s_xy, s_wh, s_obj, s_noobj = loss_sums_pallas(v16, v32)

    loss_xy = s_xy
    loss_wh = s_wh
    loss_conf = obj_scale * s_obj + noobj_scale * s_noobj
    total = loss_xy + loss_wh + loss_conf
    metrics = {"loss": total, "xy": loss_xy, "wh": loss_wh, "conf": loss_conf}
    return total, metrics


# ----------------------------------------------------------------------------
# Pure-JAX dense reference (mirrors the PyTorch math) for correctness check.
# ----------------------------------------------------------------------------
def reference_loss(xs, target, anchors,
                   obj_scale=OBJ_SCALE, noobj_scale=NOOBJ_SCALE,
                   ignore_thres=IGNORE_THRES):
    if target.shape[0] == 0:
        loss_conf = 0.0
        for xs_ in xs:
            conf = xs_[..., 4]
            ce = -(1.0 - ALPHA) * conf ** 2 * jnp.log(1.0 - conf + EPS)
            loss_conf += noobj_scale * ce.mean()
        return loss_conf

    nB = xs[0].shape[0]
    grid_sizes = [(t.shape[1], t.shape[2]) for t in xs]
    per_scale = build_targets(target, anchors, nB, grid_sizes, ignore_thres)

    loss_xy = loss_wh = loss_conf = 0.0
    for xs_, (obj, noobj, tx, ty, tw, th) in zip(xs, per_scale):
        x = xs_[..., 0]; y = xs_[..., 1]; w = xs_[..., 2]; h = xs_[..., 3]
        conf = xs_[..., 4]
        sum_ax = (1, 2, 3)
        obj_sum = obj.sum(sum_ax) + 1e-6
        noobj_sum = noobj.sum(sum_ax) + 1e-6
        dxy = (x - tx) ** 2 + (y - ty) ** 2
        dwh = (w - tw) ** 2 + (h - th) ** 2
        ce = (-ALPHA * obj * (1.0 - conf) ** 2 * jnp.log(conf + EPS)
              - (1.0 - ALPHA) * (1.0 - obj) * conf ** 2 * jnp.log(1.0 - conf + EPS))
        loss_xy += ((dxy * obj).sum(sum_ax) / obj_sum).mean()
        loss_wh += ((dwh * obj).sum(sum_ax) / obj_sum).mean()
        loss_conf += (obj_scale * ((ce * obj).sum(sum_ax) / obj_sum).mean()
                      + noobj_scale * ((ce * noobj).sum(sum_ax) / noobj_sum).mean())
    return loss_xy + loss_wh + loss_conf


if __name__ == "__main__":
    key = jax.random.PRNGKey(0)
    nB, nA = 2, 3
    grids = [(16, 16), (8, 8)]  # two detection scales

    # Anchors per scale (S=2, nA=3, wh), normalized units.
    anchors = jnp.array([[[0.08, 0.10], [0.15, 0.22], [0.30, 0.25]],
                         [[0.35, 0.45], [0.55, 0.40], [0.70, 0.75]]], jnp.float32)

    # Predictions: x, y, conf already squashed to (0,1) (as the module assumes), w/h raw.
    xs = []
    for (gh, gw) in grids:
        key, sub = jax.random.split(key)
        raw = jax.random.normal(sub, (nB, gh, gw, nA, 6), jnp.float32)
        xs_ = jnp.concatenate([jax.nn.sigmoid(raw[..., 0:2]),
                               0.2 * raw[..., 2:4],
                               jax.nn.sigmoid(raw[..., 4:5]),
                               raw[..., 5:6]], axis=-1)
        xs.append(xs_)

    # target rows: [batch_idx, gx_norm, gy_norm, gw, gh]
    target = jnp.array([
        [0.0, 0.12, 0.20, 0.10, 0.14],
        [0.0, 0.55, 0.62, 0.40, 0.38],
        [1.0, 0.33, 0.71, 0.22, 0.30],
        [1.0, 0.80, 0.15, 0.65, 0.70],
    ], jnp.float32)

    fwd = jax.jit(loss_layer_forward)

    # Main (non-empty target) branch.  bf16 diff channels bound the error to
    # well under 1%, so compare against the f32 reference at rtol=2e-2.
    total, metrics = fwd(xs, target, anchors)
    total = jax.block_until_ready(total)
    ref = jax.block_until_ready(reference_loss(xs, target, anchors))
    np.testing.assert_allclose(np.asarray(total), np.asarray(ref), rtol=2e-2, atol=1e-4)

    # Empty-target (pure no-object) branch: conf/weight stay f32 -> tight check.
    empty_target = jnp.zeros((0, 5), jnp.float32)
    total_e, _ = fwd(xs, empty_target, anchors)
    total_e = jax.block_until_ready(total_e)
    ref_e = jax.block_until_ready(reference_loss(xs, empty_target, anchors))
    np.testing.assert_allclose(np.asarray(total_e), np.asarray(ref_e), rtol=1e-4, atol=1e-6)

    print("KERNEL_OK")
</pallas_src>

<mosaic_0001>
module attributes {stable_mosaic.version = 11 : i64} {
  func.func @_loss_sums_kernel(%arg0: i32, %arg1: memref<4x16x128xbf16, #tpu.memory_space<vmem>>, %arg2: memref<2x16x128xf32, #tpu.memory_space<vmem>>, %arg3: memref<4x8x128xf32, #tpu.memory_space<vmem>>) attributes {dimension_semantics = [#tpu.dimension_semantics<parallel>], iteration_bounds = array<i64: 1>, scalar_prefetch = 0 : i64, scratch_operands = 0 : i64, tpu.core_type = #tpu.core_type<tc>, window_params = [{transform_indices = @transform_0, window_bounds = array<i64: 4, 16, 128>}, {transform_indices = @transform_1, window_bounds = array<i64: 2, 16, 128>}, {transform_indices = @transform_2, window_bounds = array<i64: 4, 8, 128>}]} {
    %c0 = arith.constant 0 : index
    %c0_0 = arith.constant 0 : index
    %c0_1 = arith.constant 0 : index
    %0 = vector.load %arg1[%c0, %c0_0, %c0_1] : memref<4x16x128xbf16, #tpu.memory_space<vmem>>, vector<1x16x128xbf16>
    %1 = vector.shape_cast %0 : vector<1x16x128xbf16> to vector<16x128xbf16>
    %2 = arith.extf %1 : vector<16x128xbf16> to vector<16x128xf32>
    %c1 = arith.constant 1 : index
    %c0_2 = arith.constant 0 : index
    %c0_3 = arith.constant 0 : index
    %3 = vector.load %arg1[%c1, %c0_2, %c0_3] : memref<4x16x128xbf16, #tpu.memory_space<vmem>>, vector<1x16x128xbf16>
    %4 = vector.shape_cast %3 : vector<1x16x128xbf16> to vector<16x128xbf16>
    %5 = arith.extf %4 : vector<16x128xbf16> to vector<16x128xf32>
    %c2 = arith.constant 2 : index
    %c0_4 = arith.constant 0 : index
    %c0_5 = arith.constant 0 : index
    %6 = vector.load %arg1[%c2, %c0_4, %c0_5] : memref<4x16x128xbf16, #tpu.memory_space<vmem>>, vector<1x16x128xbf16>
    %7 = vector.shape_cast %6 : vector<1x16x128xbf16> to vector<16x128xbf16>
    %8 = arith.extf %7 : vector<16x128xbf16> to vector<16x128xf32>
    %c3 = arith.constant 3 : index
    %c0_6 = arith.constant 0 : index
    %c0_7 = arith.constant 0 : index
    %9 = vector.load %arg1[%c3, %c0_6, %c0_7] : memref<4x16x128xbf16, #tpu.memory_space<vmem>>, vector<1x16x128xbf16>
    %10 = vector.shape_cast %9 : vector<1x16x128xbf16> to vector<16x128xbf16>
    %11 = arith.extf %10 : vector<16x128xbf16> to vector<16x128xf32>
    %c0_8 = arith.constant 0 : index
    %c0_9 = arith.constant 0 : index
    %c0_10 = arith.constant 0 : index
    %12 = vector.load %arg2[%c0_8, %c0_9, %c0_10] : memref<2x16x128xf32, #tpu.memory_space<vmem>>, vector<1x16x128xf32>
    %13 = vector.shape_cast %12 : vector<1x16x128xf32> to vector<16x128xf32>
    %c1_11 = arith.constant 1 : index
    %c0_12 = arith.constant 0 : index
    %c0_13 = arith.constant 0 : index
    %14 = vector.load %arg2[%c1_11, %c0_12, %c0_13] : memref<2x16x128xf32, #tpu.memory_space<vmem>>, vector<1x16x128xf32>
    %15 = vector.shape_cast %14 : vector<1x16x128xf32> to vector<16x128xf32>
    %cst = arith.constant 0.000000e+00 : f32
    %16 = vector.broadcast %cst : f32 to vector<16x128xf32>
    %17 = arith.maximumf %15, %16 : vector<16x128xf32>
    %18 = arith.subf %17, %15 : vector<16x128xf32>
    %cst_14 = arith.constant 0.000000e+00 : f32
    %19 = vector.broadcast %cst_14 : f32 to vector<16x128xf32>
    %20 = arith.cmpf ogt, %15, %19 : vector<16x128xf32>
    %21 = arith.mulf %2, %2 : vector<16x128xf32>
    %22 = arith.mulf %5, %5 : vector<16x128xf32>
    %23 = arith.addf %21, %22 : vector<16x128xf32>
    %24 = arith.mulf %8, %8 : vector<16x128xf32>
    %25 = arith.mulf %11, %11 : vector<16x128xf32>
    %26 = arith.addf %24, %25 : vector<16x128xf32>
    %cst_15 = arith.constant 1.000000e+00 : f32
    %27 = vector.broadcast %cst_15 : f32 to vector<16x128xf32>
    %28 = arith.subf %27, %13 : vector<16x128xf32>
    %29 = arith.select %20, %13, %28 : vector<16x128xi1>, vector<16x128xf32>
    %30 = arith.mulf %28, %28 : vector<16x128xf32>
    %cst_16 = arith.constant 2.500000e-01 : f32
    %31 = vector.broadcast %cst_16 : f32 to vector<16x128xf32>
    %32 = arith.mulf %31, %30 : vector<16x128xf32>
    %33 = arith.mulf %13, %13 : vector<16x128xf32>
    %cst_17 = arith.constant 7.500000e-01 : f32
    %34 = vector.broadcast %cst_17 : f32 to vector<16x128xf32>
    %35 = arith.mulf %34, %33 : vector<16x128xf32>
    %36 = arith.select %20, %32, %35 : vector<16x128xi1>, vector<16x128xf32>
    %cst_18 = arith.constant 0.000000e+00 : f32
    %37 = vector.broadcast %cst_18 : f32 to vector<16x128xf32>
    %38 = arith.subf %37, %36 : vector<16x128xf32>
    %cst_19 = arith.constant 1.000000e-16 : f32
    %39 = vector.broadcast %cst_19 : f32 to vector<16x128xf32>
    %40 = arith.addf %29, %39 : vector<16x128xf32>
    %41 = math.log %40 : vector<16x128xf32>
    %42 = arith.mulf %38, %41 : vector<16x128xf32>
    %43 = arith.mulf %23, %17 : vector<16x128xf32>
    %44 = vector.shape_cast %43 : vector<16x128xf32> to vector<2x8x128xf32>
    %cst_20 = arith.constant dense<0.000000e+00> : vector<8x128xf32>
    %45 = vector.multi_reduction <add>, %44, %cst_20 [0] : vector<2x8x128xf32> to vector<8x128xf32>
    %c0_21 = arith.constant 0 : index
    %c0_22 = arith.constant 0 : index
    %c0_23 = arith.constant 0 : index
    %46 = vector.load %arg3[%c0_21, %c0_22, %c0_23] : memref<4x8x128xf32, #tpu.memory_space<vmem>>, vector<1x8x128xf32>
    %47 = vector.shape_cast %46 : vector<1x8x128xf32> to vector<8x128xf32>
    %48 = vector.shape_cast %45 : vector<8x128xf32> to vector<1x8x128xf32>
    tpu.vector_store %arg3[%c0_21, %c0_22, %c0_23], %48 {strides = array<i32>} : memref<4x8x128xf32, #tpu.memory_space<vmem>>, vector<1x8x128xf32>,
    %49 = arith.mulf %26, %17 : vector<16x128xf32>
    %50 = vector.shape_cast %49 : vector<16x128xf32> to vector<2x8x128xf32>
    %cst_24 = arith.constant dense<0.000000e+00> : vector<8x128xf32>
    %51 = vector.multi_reduction <add>, %50, %cst_24 [0] : vector<2x8x128xf32> to vector<8x128xf32>
    %c1_25 = arith.constant 1 : index
    %c0_26 = arith.constant 0 : index
    %c0_27 = arith.constant 0 : index
    %52 = vector.load %arg3[%c1_25, %c0_26, %c0_27] : memref<4x8x128xf32, #tpu.memory_space<vmem>>, vector<1x8x128xf32>
    %53 = vector.shape_cast %52 : vector<1x8x128xf32> to vector<8x128xf32>
    %54 = vector.shape_cast %51 : vector<8x128xf32> to vector<1x8x128xf32>
    tpu.vector_store %arg3[%c1_25, %c0_26, %c0_27], %54 {strides = array<i32>} : memref<4x8x128xf32, #tpu.memory_space<vmem>>, vector<1x8x128xf32>,
    %55 = arith.mulf %42, %17 : vector<16x128xf32>
    %56 = vector.shape_cast %55 : vector<16x128xf32> to vector<2x8x128xf32>
    %cst_28 = arith.constant dense<0.000000e+00> : vector<8x128xf32>
    %57 = vector.multi_reduction <add>, %56, %cst_28 [0] : vector<2x8x128xf32> to vector<8x128xf32>
    %c2_29 = arith.constant 2 : index
    %c0_30 = arith.constant 0 : index
    %c0_31 = arith.constant 0 : index
    %58 = vector.load %arg3[%c2_29, %c0_30, %c0_31] : memref<4x8x128xf32, #tpu.memory_space<vmem>>, vector<1x8x128xf32>
    %59 = vector.shape_cast %58 : vector<1x8x128xf32> to vector<8x128xf32>
    %60 = vector.shape_cast %57 : vector<8x128xf32> to vector<1x8x128xf32>
    tpu.vector_store %arg3[%c2_29, %c0_30, %c0_31], %60 {strides = array<i32>} : memref<4x8x128xf32, #tpu.memory_space<vmem>>, vector<1x8x128xf32>,
    %61 = arith.mulf %42, %18 : vector<16x128xf32>
    %62 = vector.shape_cast %61 : vector<16x128xf32> to vector<2x8x128xf32>
    %cst_32 = arith.constant dense<0.000000e+00> : vector<8x128xf32>
    %63 = vector.multi_reduction <add>, %62, %cst_32 [0] : vector<2x8x128xf32> to vector<8x128xf32>
    %c3_33 = arith.constant 3 : index
    %c0_34 = arith.constant 0 : index
    %c0_35 = arith.constant 0 : index
    %64 = vector.load %arg3[%c3_33, %c0_34, %c0_35] : memref<4x8x128xf32, #tpu.memory_space<vmem>>, vector<1x8x128xf32>
    %65 = vector.shape_cast %64 : vector<1x8x128xf32> to vector<8x128xf32>
    %66 = vector.shape_cast %63 : vector<8x128xf32> to vector<1x8x128xf32>
    tpu.vector_store %arg3[%c3_33, %c0_34, %c0_35], %66 {strides = array<i32>} : memref<4x8x128xf32, #tpu.memory_space<vmem>>, vector<1x8x128xf32>,
    return
  }
  func.func @transform_0(%arg0: i32) -> (i32, i32, i32) {
    %c0_i32 = arith.constant 0 : i32
    %c0_i32_0 = arith.constant 0 : i32
    %c0_i32_1 = arith.constant 0 : i32
    return %c0_i32, %arg0, %c0_i32_0 : i32, i32, i32
  }
  func.func @transform_1(%arg0: i32) -> (i32, i32, i32) {
    %c0_i32 = arith.constant 0 : i32
    %c0_i32_0 = arith.constant 0 : i32
    %c0_i32_1 = arith.constant 0 : i32
    return %c0_i32, %arg0, %c0_i32_0 : i32, i32, i32
  }
  func.func @transform_2(%arg0: i32) -> (i32, i32, i32) {
    %c0_i32 = arith.constant 0 : i32
    %c0_i32_0 = arith.constant 0 : i32
    %c0_i32_1 = arith.constant 0 : i32
    return %arg0, %c0_i32, %c0_i32_0 : i32, i32, i32
  }
}

</mosaic_0001>

<llo_original>
// kernel: mul.36
$region0: #{mul.36}
  #allocation0 [shape = 's32[1]{0}', space=sflag, size = 0x4, scoped, tag = 'scoped memory for mul.36']
  %s0 = inlined_call_operand.vmem [shape: f32[4], index: 0, kind: input, shape index: {}]
  %s1 = inlined_call_operand.vmem [shape: f32[4], index: 1, kind: input, shape index: {}]
  %s2 = inlined_call_operand.vmem [shape: f32[4], index: 2, kind: output, shape index: {}]
  %v3 = vld [vmem:[%s0] sm:$0x1]
  %v4 = vld [vmem:[%s1] sm:$0x1]
  %5 = xla_tuple %v3, %v4
  %6 = xla_tuple %5
  %v7 = vmul.f32 %v3, %v4
  %8 = xla_tuple %v7
  %9 = vst [vmem:[%s2] sm:$0x1] %v7

// kernel: loss_layer_forward.1
$region0: #{loss_layer_forward.1}
  #allocation0 [shape = 'u32[]', space=smem, size = 0x4, offset = 0x4, fixed_abs, tag = 'smem constant byte address 0x4 - core index']
  #allocation1 [shape = 'u32[144,128]{1,0:T(1,128)}', space=vmem, size = 0x12000, scoped, tag = 'internal scratch']
  %s0 = inlined_call_operand.vmem [shape: bf16[4,16,128], index: 0, kind: input, shape index: {}]
  %s1 = inlined_call_operand.vmem [shape: f32[2,16,128], index: 1, kind: input, shape index: {}]
  %s2 = inlined_call_operand.vmem [shape: f32[4,8,128], index: 2, kind: output, shape index: {}]
  %s3 = sld [smem:[#allocation0]]
  $region18: #{loss_layer_forward.1} parent=0
    _
  %s5 = ssub.s32 1, %s3
  %s6 = scalar_select 0, %s5, %s3
  // Predicated region
  $region2: #{loss_layer_forward.1} parent=0 // pred_check
    _
  $region3: #{loss_layer_forward.1} parent=0 // pred_check_branch
    %8 = sbr.rel (0) target = $region5
  $region4: #{loss_layer_forward.1} parent=0 // pred_region
    _
  $region5: #{loss_layer_forward.1} parent=0 // pred_fallthru
    _
  // Predicated region
  $region6: #{loss_layer_forward.1} parent=0 // pred_check
    _
  $region7: #{loss_layer_forward.1} parent=0 // pred_check_branch
    %10 = sbr.rel (0) target = $region9
  $region8: #{loss_layer_forward.1} parent=0 // pred_region
    _
  $region9: #{loss_layer_forward.1} parent=0 // pred_fallthru
    _
  %v11 = vld [vmem:[%s0] sm:$0xf]
  %v12 = vld [vmem:[%s0 + $0x4] sm:$0xf]
  %v13 = vunpack.c.l.bf16 %v11
  %v14 = vunpack.c.l.bf16 %v12
  %s15 = scalar_lea.vmem %s0, 8
  %v16 = vld [vmem:[%s15] sm:$0xf]
  %v17 = vld [vmem:[%s15 + $0x4] sm:$0xf]
  %v18 = vunpack.c.l.bf16 %v16
  %v19 = vunpack.c.l.bf16 %v17
  %s20 = scalar_lea.vmem %s0, 16
  %v21 = vld [vmem:[%s20] sm:$0xf]
  %v22 = vld [vmem:[%s20 + $0x4] sm:$0xf]
  %v23 = vunpack.c.l.bf16 %v21
  %v24 = vunpack.c.l.bf16 %v22
  %s25 = scalar_lea.vmem %s0, 24
  %v26 = vld [vmem:[%s25] sm:$0xf]
  %v27 = vld [vmem:[%s25 + $0x4] sm:$0xf]
  %v28 = vunpack.c.l.bf16 %v26
  %v29 = vunpack.c.l.bf16 %v27
  %v30 = vld [vmem:[%s1] sm:$0xff]
  %v31 = vld [vmem:[%s1 + $0x8] sm:$0xff]
  %s32 = scalar_lea.vmem %s1, 16
  %v33 = vld [vmem:[%s32] sm:$0xff]
  %v34 = vld [vmem:[%s32 + $0x8] sm:$0xff]
  %v35 = vmax.f32 %v33, 0.0
  %v36 = vmax.f32 %v34, 0.0
  %v37 = vsub.f32 %v35, %v33
  %v38 = vsub.f32 %v36, %v34
  %vm39 = vcmp.gt.f32.partialorder %v33, 0.0
  %vm40 = vcmp.gt.f32.partialorder %v34, 0.0
  %v41 = vmul.f32 %v13, %v13
  %v42 = vmul.f32 %v14, %v14
  %v43 = vmul.f32 %v18, %v18
  %v44 = vmul.f32 %v19, %v19
  %v45 = vadd.f32 %v41, %v43
  %v46 = vadd.f32 %v42, %v44
  %v47 = vmul.f32 %v23, %v23
  %v48 = vmul.f32 %v24, %v24
  %v49 = vmul.f32 %v28, %v28
  %v50 = vmul.f32 %v29, %v29
  %v51 = vadd.f32 %v47, %v49
  %v52 = vadd.f32 %v48, %v50
  %v53 = vsub.f32 1.0, %v30
  %v54 = vsub.f32 1.0, %v31
  %v55 = vsel %vm39, %v30, %v53
  %v56 = vsel %vm40, %v31, %v54
  %v57 = vmul.f32 %v53, %v53
  %v58 = vmul.f32 %v54, %v54
  %v59 = vmul.f32 %v57, 0.25
  %v60 = vmul.f32 %v58, 0.25
  %v61 = vmul.f32 %v30, %v30
  %v62 = vmul.f32 %v31, %v31
  %v63 = vmul.f32 %v61, 0.75
  %v64 = vmul.f32 %v62, 0.75
  %v65 = vsel %vm39, %v59, %v63
  %v66 = vsel %vm40, %v60, %v64
  %v67 = vsub.f32 0.0, %v65
  %v68 = vsub.f32 0.0, %v66
  %v69 = vadd.f32 %v55, 1e-16
  %v70 = vadd.f32 %v56, 1e-16
  %v71 = vlog2.pop %v69
  %v72 = vmul.f32 %v71, 0.6931472
  %v73 = vlog2.pop %v70
  %v74 = vmul.f32 %v73, 0.6931472
  %v75 = vmul.f32 %v67, %v72
  %v76 = vmul.f32 %v68, %v74
  %v77 = vmul.f32 %v45, %v35
  %v78 = vmul.f32 %v46, %v36
  %v79 = vadd.f32 %v77, %v78
  %80 = vst [vmem:[%s2] sm:$0xff] %v79
  %v81 = vmul.f32 %v51, %v35
  %v82 = vmul.f32 %v52, %v36
  %v83 = vadd.f32 %v81, %v82
  %s84 = scalar_lea.vmem %s2, 8
  %85 = vst [vmem:[%s84] sm:$0xff] %v83
  %v86 = vmul.f32 %v75, %v35
  %v87 = vmul.f32 %v76, %v36
  %v88 = vadd.f32 %v86, %v87
  %s89 = scalar_lea.vmem %s2, 16
  %90 = vst [vmem:[%s89] sm:$0xff] %v88
  %v91 = vmul.f32 %v75, %v37
  %v92 = vmul.f32 %v76, %v38
  %v93 = vadd.f32 %v91, %v92
  %s94 = scalar_lea.vmem %s2, 24
  %95 = vst [vmem:[%s94] sm:$0xff] %v93
  // Predicated region
  $region10: #{loss_layer_forward.1} parent=0 // pred_check
    _
  $region11: #{loss_layer_forward.1} parent=0 // pred_check_branch
    %97 = sbr.rel (0) target = $region13
  $region12: #{loss_layer_forward.1} parent=0 // pred_region
    _
  $region13: #{loss_layer_forward.1} parent=0 // pred_fallthru
    _
  // Predicated region
  $region14: #{loss_layer_forward.1} parent=0 // pred_check
    _
  $region15: #{loss_layer_forward.1} parent=0 // pred_check_branch
    %99 = sbr.rel (0) target = $region17
  $region16: #{loss_layer_forward.1} parent=0 // pred_region
    _
  $region17: #{loss_layer_forward.1} parent=0 // pred_fallthru
    _

</llo_original>
